<compile_context>
chip_gen: v6e
topology: v6e:2x2x1
jax: 0.10.0
libtpu: 0.0.40
codegen_flags: <defaults>
</compile_context>

<pallas_src>
import functools

import jax
import jax.numpy as jnp
from jax.experimental import pallas as pl
from jax.experimental.pallas import tpu as pltpu

NUM_CLASSES = 7
IN_DIM = 512
HID_DIM = 64

# Lane-dense padded dims (multiples of 128). Do NOT shrink HID_PAD back to 64:
# weights are fetched once, the kernel is HBM-bound on x, and 128 keeps h lane-dense.
HID_PAD = 128
CLS_PAD = 128
# Batch tile: big enough that per-grid-step overhead (~0.35 us) is amortized.
MAX_TILE_B = 2048


def classifier_kernel(x_ref, w1_ref, b1_ref, w2_ref, b2_ref, o_ref):
    # x_ref : (TB, 512)  f32   (cast to bf16 here; VPU cast is free, kernel is DMA-bound)
    # w1_ref: (512, 128) bf16  (hidden padded 64 -> 128 with zeros)
    # b1_ref: (1, 128)   f32
    # w2_ref: (128, 128) bf16  (classes padded 7 -> 128 with zeros)
    # b2_ref: (1, 128)   f32
    # o_ref : (TB, 128)  bf16  (lane-dense output; sliced to C and cast outside)
    x = x_ref[...].astype(jnp.bfloat16)

    # Linear 1 (bf16 MXU, f32 accumulate) + bias + ReLU in f32.
    h = jnp.dot(x, w1_ref[...], preferred_element_type=jnp.float32) + b1_ref[...]
    h = jnp.maximum(h, 0.0)

    # Linear 2 (bf16 MXU, f32 accumulate) + bias.
    out = jnp.dot(h.astype(jnp.bfloat16), w2_ref[...],
                  preferred_element_type=jnp.float32) + b2_ref[...]
    o_ref[...] = out.astype(o_ref.dtype)


def _round_up(n, m):
    return ((n + m - 1) // m) * m


@functools.partial(jax.jit, static_argnames=("num_classes",))
def classifier_forward(x, w1, b1, w2, b2, *, num_classes=NUM_CLASSES):
    """x: (B, 512) f32; w1: (512, 64); b1: (64,); w2: (64, C); b2: (C,)."""
    B = x.shape[0]
    C = num_classes

    # ---- pad hidden / class dims to 128 lanes (zeros => identical math) ----
    w1_p = jnp.zeros((IN_DIM, HID_PAD), jnp.float32).at[:, :HID_DIM].set(w1)
    b1_p = jnp.zeros((1, HID_PAD), jnp.float32).at[:, :HID_DIM].set(b1)
    w2_p = jnp.zeros((HID_PAD, CLS_PAD), jnp.float32).at[:HID_DIM, :C].set(w2)
    b2_p = jnp.zeros((1, CLS_PAD), jnp.float32).at[:, :C].set(b2)

    # bf16 for the MXU operands; biases stay f32 (bias-add / ReLU in f32).
    w1_bf = w1_p.astype(jnp.bfloat16)
    w2_bf = w2_p.astype(jnp.bfloat16)

    # ---- batch tiling: no wrapper-side pad of x; grid handles the ragged tail ----
    tile_b = min(MAX_TILE_B, _round_up(B, 16))
    grid = (pl.cdiv(B, tile_b),)

    flops = 2 * B * IN_DIM * HID_PAD + 2 * B * HID_PAD * CLS_PAD
    bytes_accessed = (B * IN_DIM * 4                      # x read (f32)
                      + B * CLS_PAD * 2                   # out write (bf16)
                      + (IN_DIM * HID_PAD + HID_PAD * CLS_PAD) * 2   # weights (bf16)
                      + (HID_PAD + CLS_PAD) * 4)          # biases (f32)

    out_padded = pl.pallas_call(
        classifier_kernel,
        out_shape=jax.ShapeDtypeStruct((B, CLS_PAD), jnp.bfloat16),
        grid_spec=pltpu.PrefetchScalarGridSpec(
            num_scalar_prefetch=0,
            grid=grid,
            in_specs=[
                # x streams through VMEM, double-buffered by default (partial last
                # block is padded with garbage rows; the corresponding OOB output
                # rows are discarded by Pallas).
                pl.BlockSpec((tile_b, IN_DIM), lambda i: (i, 0)),
                # Weights / biases: constant index_map -> fetched once, resident.
                pl.BlockSpec((IN_DIM, HID_PAD), lambda i: (0, 0)),
                pl.BlockSpec((1, HID_PAD), lambda i: (0, 0)),
                pl.BlockSpec((HID_PAD, CLS_PAD), lambda i: (0, 0)),
                pl.BlockSpec((1, CLS_PAD), lambda i: (0, 0)),
            ],
            out_specs=pl.BlockSpec((tile_b, CLS_PAD), lambda i: (i, 0)),
        ),
        compiler_params=pltpu.CompilerParams(
            dimension_semantics=("parallel",),
            vmem_limit_bytes=32 * 1024 * 1024),
        cost_estimate=pl.CostEstimate(
            flops=flops, transcendentals=0, bytes_accessed=bytes_accessed),
    )(x, w1_bf, b1_p, w2_bf, b2_p)

    # Slice away class padding outside the kernel; restore f32 (tiny B x C cast).
    return out_padded[:, :C].astype(jnp.float32)


def init_params(key, num_classes=NUM_CLASSES):
    # PyTorch-style uniform init, stored transposed (in_features, out_features)
    # so the kernel computes plain x @ W + b.
    k1, k2, k3, k4 = jax.random.split(key, 4)
    bound1 = 1.0 / (IN_DIM ** 0.5)
    bound2 = 1.0 / (HID_DIM ** 0.5)
    w1 = jax.random.uniform(k1, (IN_DIM, HID_DIM), jnp.float32, -bound1, bound1)
    b1 = jax.random.uniform(k2, (HID_DIM,), jnp.float32, -bound1, bound1)
    w2 = jax.random.uniform(k3, (HID_DIM, num_classes), jnp.float32, -bound2, bound2)
    b2 = jax.random.uniform(k4, (num_classes,), jnp.float32, -bound2, bound2)
    return w1, b1, w2, b2


if __name__ == "__main__":
    key = jax.random.PRNGKey(0)
    kx, kp = jax.random.split(key)

    B = 8  # small batch
    x = jax.random.normal(kx, (B, IN_DIM), jnp.float32)
    w1, b1, w2, b2 = init_params(kp)

    out = classifier_forward(x, w1, b1, w2, b2, num_classes=NUM_CLASSES)
    out = jax.block_until_ready(out)

    # Reference in plain JAX (f32). Kernel uses bf16 operands + bf16 out, so allow
    # bf16-level tolerance.
    ref = jnp.maximum(x @ w1 + b1[None, :], 0.0) @ w2 + b2[None, :]
    assert out.shape == (B, NUM_CLASSES), out.shape
    assert jnp.allclose(out, ref, atol=3e-2, rtol=3e-2), float(
        jnp.max(jnp.abs(out - ref)))

    print("KERNEL_OK")
</pallas_src>

<mosaic_0001>
module attributes {stable_mosaic.version = 11 : i64} {
  func.func @classifier_kernel(%arg0: i32, %arg1: memref<16x512xf32, #tpu.memory_space<vmem>>, %arg2: memref<512x128xbf16, #tpu.memory_space<vmem>>, %arg3: memref<1x128xf32, #tpu.memory_space<vmem>>, %arg4: memref<128x128xbf16, #tpu.memory_space<vmem>>, %arg5: memref<1x128xf32, #tpu.memory_space<vmem>>, %arg6: memref<16x128xbf16, #tpu.memory_space<vmem>>) attributes {dimension_semantics = [#tpu.dimension_semantics<parallel>], iteration_bounds = array<i64: 1>, scalar_prefetch = 0 : i64, scratch_operands = 0 : i64, tpu.core_type = #tpu.core_type<tc>, window_params = [{transform_indices = @transform_0, window_bounds = array<i64: 16, 512>}, {pipeline_mode = #tpu.pipeline_mode<synchronous>, transform_indices = @transform_1, window_bounds = array<i64: 512, 128>}, {pipeline_mode = #tpu.pipeline_mode<synchronous>, transform_indices = @transform_2, window_bounds = array<i64: 1, 128>}, {pipeline_mode = #tpu.pipeline_mode<synchronous>, transform_indices = @transform_3, window_bounds = array<i64: 128, 128>}, {pipeline_mode = #tpu.pipeline_mode<synchronous>, transform_indices = @transform_4, window_bounds = array<i64: 1, 128>}, {transform_indices = @transform_5, window_bounds = array<i64: 16, 128>}]} {
    %c0 = arith.constant 0 : index
    %c0_0 = arith.constant 0 : index
    %0 = vector.load %arg1[%c0, %c0_0] : memref<16x512xf32, #tpu.memory_space<vmem>>, vector<16x512xf32>
    %1 = arith.truncf %0 : vector<16x512xf32> to vector<16x512xbf16>
    %c0_1 = arith.constant 0 : index
    %c0_2 = arith.constant 0 : index
    %2 = vector.load %arg2[%c0_1, %c0_2] : memref<512x128xbf16, #tpu.memory_space<vmem>>, vector<512x128xbf16>
    %cst = arith.constant dense<0.000000e+00> : vector<16x128xf32>
    %3 = tpu.matmul %1, %2, %cst {dimension_numbers = #tpu.dot_dimension_numbers<[1], [0], [0], [1], [0, 0, 1, 1], [], []>} : vector<16x512xbf16>, vector<512x128xbf16>, vector<16x128xf32> -> vector<16x128xf32>
    %c0_3 = arith.constant 0 : index
    %c0_4 = arith.constant 0 : index
    %4 = vector.load %arg3[%c0_3, %c0_4] : memref<1x128xf32, #tpu.memory_space<vmem>>, vector<1x128xf32>
    %5 = vector.broadcast %4 : vector<1x128xf32> to vector<16x128xf32>
    %6 = arith.addf %3, %5 : vector<16x128xf32>
    %cst_5 = arith.constant 0.000000e+00 : f32
    %7 = vector.broadcast %cst_5 : f32 to vector<16x128xf32>
    %8 = arith.maximumf %6, %7 : vector<16x128xf32>
    %9 = arith.truncf %8 : vector<16x128xf32> to vector<16x128xbf16>
    %c0_6 = arith.constant 0 : index
    %c0_7 = arith.constant 0 : index
    %10 = vector.load %arg4[%c0_6, %c0_7] : memref<128x128xbf16, #tpu.memory_space<vmem>>, vector<128x128xbf16>
    %cst_8 = arith.constant dense<0.000000e+00> : vector<16x128xf32>
    %11 = tpu.matmul %9, %10, %cst_8 {dimension_numbers = #tpu.dot_dimension_numbers<[1], [0], [0], [1], [0, 0, 1, 1], [], []>} : vector<16x128xbf16>, vector<128x128xbf16>, vector<16x128xf32> -> vector<16x128xf32>
    %c0_9 = arith.constant 0 : index
    %c0_10 = arith.constant 0 : index
    %12 = vector.load %arg5[%c0_9, %c0_10] : memref<1x128xf32, #tpu.memory_space<vmem>>, vector<1x128xf32>
    %13 = vector.broadcast %12 : vector<1x128xf32> to vector<16x128xf32>
    %14 = arith.addf %11, %13 : vector<16x128xf32>
    %15 = arith.truncf %14 : vector<16x128xf32> to vector<16x128xbf16>
    %c0_11 = arith.constant 0 : index
    %c0_12 = arith.constant 0 : index
    %16 = vector.load %arg6[%c0_11, %c0_12] : memref<16x128xbf16, #tpu.memory_space<vmem>>, vector<16x128xbf16>
    tpu.vector_store %arg6[%c0_11, %c0_12], %15 {strides = array<i32>} : memref<16x128xbf16, #tpu.memory_space<vmem>>, vector<16x128xbf16>,
    return
  }
  func.func @transform_0(%arg0: i32) -> (i32, i32) {
    %c0_i32 = arith.constant 0 : i32
    %c0_i32_0 = arith.constant 0 : i32
    return %arg0, %c0_i32 : i32, i32
  }
  func.func @transform_1(%arg0: i32) -> (i32, i32) {
    %c0_i32 = arith.constant 0 : i32
    %c0_i32_0 = arith.constant 0 : i32
    %c0_i32_1 = arith.constant 0 : i32
    return %c0_i32, %c0_i32_0 : i32, i32
  }
  func.func @transform_2(%arg0: i32) -> (i32, i32) {
    %c0_i32 = arith.constant 0 : i32
    %c0_i32_0 = arith.constant 0 : i32
    %c0_i32_1 = arith.constant 0 : i32
    return %c0_i32, %c0_i32_0 : i32, i32
  }
  func.func @transform_3(%arg0: i32) -> (i32, i32) {
    %c0_i32 = arith.constant 0 : i32
    %c0_i32_0 = arith.constant 0 : i32
    %c0_i32_1 = arith.constant 0 : i32
    return %c0_i32, %c0_i32_0 : i32, i32
  }
  func.func @transform_4(%arg0: i32) -> (i32, i32) {
    %c0_i32 = arith.constant 0 : i32
    %c0_i32_0 = arith.constant 0 : i32
    %c0_i32_1 = arith.constant 0 : i32
    return %c0_i32, %c0_i32_0 : i32, i32
  }
  func.func @transform_5(%arg0: i32) -> (i32, i32) {
    %c0_i32 = arith.constant 0 : i32
    %c0_i32_0 = arith.constant 0 : i32
    return %arg0, %c0_i32 : i32, i32
  }
}

</mosaic_0001>

<llo_original>
// kernel: classifier_forward.1
$region0: #{classifier_forward.1}
  #allocation0 [shape = 'u32[]', space=smem, size = 0x4, offset = 0x4, fixed_abs, tag = 'smem constant byte address 0x4 - core index']
  #allocation1 [shape = 'u32[144,128]{1,0:T(1,128)}', space=vmem, size = 0x12000, scoped, tag = 'internal scratch']
  %s0 = inlined_call_operand.vmem [shape: f32[8,512], index: 0, kind: input, shape index: {}]
  %s1 = inlined_call_operand.vmem [shape: bf16[512,128], index: 1, kind: input, shape index: {}]
  %s2 = inlined_call_operand.vmem [shape: f32[1,128], index: 2, kind: input, shape index: {}]
  %s3 = inlined_call_operand.vmem [shape: bf16[128,128], index: 3, kind: input, shape index: {}]
  %s4 = inlined_call_operand.vmem [shape: f32[1,128], index: 4, kind: input, shape index: {}]
  %s5 = inlined_call_operand.vmem [shape: bf16[8,128], index: 5, kind: output, shape index: {}]
  %s6 = sld [smem:[#allocation0]]
  $region60: #{classifier_forward.1} parent=0
    _
  %s8 = ssub.s32 1, %s6
  %s9 = scalar_select 0, %s8, %s6
  $region1: #{classifier_forward.1} parent=0
    #allocation2 [shape = 'u8[4096]{0}', space=vmem, size = 0x1000, scoped, tag = 'output window, operand 0, single buffered']
    // Predicated region
    $region2: #{classifier_forward.1} parent=1 // pred_check
      _
    $region3: #{classifier_forward.1} parent=1 // pred_check_branch
      %11 = sbr.rel (0) target = $region5
    $region4: #{classifier_forward.1} parent=1 // pred_region
      _
    $region5: #{classifier_forward.1} parent=1 // pred_fallthru
      _
    // Predicated region
    $region6: #{classifier_forward.1} parent=1 // pred_check
      _
    $region7: #{classifier_forward.1} parent=1 // pred_check_branch
      %13 = sbr.rel (0) target = $region9
    $region8: #{classifier_forward.1} parent=1 // pred_region
      _
    $region9: #{classifier_forward.1} parent=1 // pred_fallthru
      _
    // Predicated region
    $region10: #{classifier_forward.1} parent=1 // pred_check
      _
    $region11: #{classifier_forward.1} parent=1 // pred_check_branch
      %15 = sbr.rel (0) target = $region13
    $region12: #{classifier_forward.1} parent=1 // pred_region
      _
    $region13: #{classifier_forward.1} parent=1 // pred_fallthru
      _
    // Predicated region
    $region14: #{classifier_forward.1} parent=1 // pred_check
      _
    $region15: #{classifier_forward.1} parent=1 // pred_check_branch
      %17 = sbr.rel (0) target = $region17
    $region16: #{classifier_forward.1} parent=1 // pred_region
      _
    $region17: #{classifier_forward.1} parent=1 // pred_fallthru
      _
    // Predicated region
    $region18: #{classifier_forward.1} parent=1 // pred_check
      _
    $region19: #{classifier_forward.1} parent=1 // pred_check_branch
      %19 = sbr.rel (0) target = $region21
    $region20: #{classifier_forward.1} parent=1 // pred_region
      _
    $region21: #{classifier_forward.1} parent=1 // pred_fallthru
      _
    %v21 = vld [vmem:[%s0] sm:$0xff]
    %v22 = vld [vmem:[%s0 + $0x8] sm:$0xff]
    %v23 = vld [vmem:[%s0 + $0x10] sm:$0xff]
    %v24 = vld [vmem:[%s0 + $0x18] sm:$0xff]
    %v25 = vld [vmem:[%s0 + $0x20] sm:$0xff]
    %v26 = vld [vmem:[%s0 + $0x28] sm:$0xff]
    %v27 = vld [vmem:[%s0 + $0x30] sm:$0xff]
    %v28 = vld [vmem:[%s0 + $0x38] sm:$0xff]
    %v29 = vpack.c.bf16 %v25, %v21
    %v30 = vpack.c.bf16 %v26, %v22
    %v31 = vpack.c.bf16 %v27, %v23
    %v32 = vpack.c.bf16 %v28, %v24
    %v33 = vld [vmem:[%s1] sm:$0xf]
    %v34 = vld [vmem:[%s1 + $0x4] sm:$0xf]
    %v35 = vld [vmem:[%s1 + $0x8] sm:$0xf]
    %v36 = vld [vmem:[%s1 + $0xc] sm:$0xf]
    %v37 = vld [vmem:[%s1 + $0x10] sm:$0xf]
    %v38 = vld [vmem:[%s1 + $0x14] sm:$0xf]
    %v39 = vld [vmem:[%s1 + $0x18] sm:$0xf]
    %v40 = vld [vmem:[%s1 + $0x1c] sm:$0xf]
    %v41 = vld [vmem:[%s1 + $0x20] sm:$0xf]
    %v42 = vld [vmem:[%s1 + $0x24] sm:$0xf]
    %v43 = vld [vmem:[%s1 + $0x28] sm:$0xf]
    %v44 = vld [vmem:[%s1 + $0x2c] sm:$0xf]
    %v45 = vld [vmem:[%s1 + $0x30] sm:$0xf]
    %v46 = vld [vmem:[%s1 + $0x34] sm:$0xf]
    %v47 = vld [vmem:[%s1 + $0x38] sm:$0xf]
    %v48 = vld [vmem:[%s1 + $0x3c] sm:$0xf]
    %v49 = vld [vmem:[%s1 + $0x40] sm:$0xf]
    %v50 = vld [vmem:[%s1 + $0x44] sm:$0xf]
    %v51 = vld [vmem:[%s1 + $0x48] sm:$0xf]
    %v52 = vld [vmem:[%s1 + $0x4c] sm:$0xf]
    %v53 = vld [vmem:[%s1 + $0x50] sm:$0xf]
    %v54 = vld [vmem:[%s1 + $0x54] sm:$0xf]
    %v55 = vld [vmem:[%s1 + $0x58] sm:$0xf]
    %v56 = vld [vmem:[%s1 + $0x5c] sm:$0xf]
    %v57 = vld [vmem:[%s1 + $0x60] sm:$0xf]
    %v58 = vld [vmem:[%s1 + $0x64] sm:$0xf]
    %v59 = vld [vmem:[%s1 + $0x68] sm:$0xf]
    %v60 = vld [vmem:[%s1 + $0x6c] sm:$0xf]
    %v61 = vld [vmem:[%s1 + $0x70] sm:$0xf]
    %v62 = vld [vmem:[%s1 + $0x74] sm:$0xf]
    %v63 = vld [vmem:[%s1 + $0x78] sm:$0xf]
    %v64 = vld [vmem:[%s1 + $0x7c] sm:$0xf]
    %v65 = vld [vmem:[%s1 + $0x80] sm:$0xf]
    %v66 = vld [vmem:[%s1 + $0x84] sm:$0xf]
    %v67 = vld [vmem:[%s1 + $0x88] sm:$0xf]
    %v68 = vld [vmem:[%s1 + $0x8c] sm:$0xf]
    %v69 = vld [vmem:[%s1 + $0x90] sm:$0xf]
    %v70 = vld [vmem:[%s1 + $0x94] sm:$0xf]
    %v71 = vld [vmem:[%s1 + $0x98] sm:$0xf]
    %v72 = vld [vmem:[%s1 + $0x9c] sm:$0xf]
    %v73 = vld [vmem:[%s1 + $0xa0] sm:$0xf]
    %v74 = vld [vmem:[%s1 + $0xa4] sm:$0xf]
    %v75 = vld [vmem:[%s1 + $0xa8] sm:$0xf]
    %v76 = vld [vmem:[%s1 + $0xac] sm:$0xf]
    %v77 = vld [vmem:[%s1 + $0xb0] sm:$0xf]
    %v78 = vld [vmem:[%s1 + $0xb4] sm:$0xf]
    %v79 = vld [vmem:[%s1 + $0xb8] sm:$0xf]
    %v80 = vld [vmem:[%s1 + $0xbc] sm:$0xf]
    %v81 = vld [vmem:[%s1 + $0xc0] sm:$0xf]
    %v82 = vld [vmem:[%s1 + $0xc4] sm:$0xf]
    %v83 = vld [vmem:[%s1 + $0xc8] sm:$0xf]
    %v84 = vld [vmem:[%s1 + $0xcc] sm:$0xf]
    %v85 = vld [vmem:[%s1 + $0xd0] sm:$0xf]
    %v86 = vld [vmem:[%s1 + $0xd4] sm:$0xf]
    %v87 = vld [vmem:[%s1 + $0xd8] sm:$0xf]
    %v88 = vld [vmem:[%s1 + $0xdc] sm:$0xf]
    %v89 = vld [vmem:[%s1 + $0xe0] sm:$0xf]
    %v90 = vld [vmem:[%s1 + $0xe4] sm:$0xf]
    %v91 = vld [vmem:[%s1 + $0xe8] sm:$0xf]
    %v92 = vld [vmem:[%s1 + $0xec] sm:$0xf]
    %v93 = vld [vmem:[%s1 + $0xf0] sm:$0xf]
    %v94 = vld [vmem:[%s1 + $0xf4] sm:$0xf]
    %v95 = vld [vmem:[%s1 + $0xf8] sm:$0xf]
    %v96 = vld [vmem:[%s1 + $0xfc] sm:$0xf]
    %v97 = vld [vmem:[%s2] sm:$0x1]
    %v99 = vlaneseq
    %v100 = vshrl.u32 %v99, 7
    %v101 = vsub.s32 0, %v100
    %v102 = vrot.slane %v97, %v101
    %v168 = vunpack.c.l.b16 %v33
    %v169 = vunpack.c.l.b16 %v34
    %v170 = vunpack.c.l.b16 %v35
    %v171 = vunpack.c.l.b16 %v36
    %v172 = vunpack.c.l.b16 %v37
    %v173 = vunpack.c.l.b16 %v38
    %v174 = vunpack.c.l.b16 %v39
    %v175 = vunpack.c.l.b16 %v40
    %v176 = vunpack.c.l.b16 %v41
    %v177 = vunpack.c.l.b16 %v42
    %v178 = vunpack.c.l.b16 %v43
    %v179 = vunpack.c.l.b16 %v44
    %v180 = vunpack.c.l.b16 %v45
    %v181 = vunpack.c.l.b16 %v46
    %v182 = vunpack.c.l.b16 %v47
    %v183 = vunpack.c.l.b16 %v48
    %v184 = vunpack.c.l.b16 %v49
    %v185 = vunpack.c.l.b16 %v50
    %v186 = vunpack.c.l.b16 %v51
    %v187 = vunpack.c.l.b16 %v52
    %v188 = vunpack.c.l.b16 %v53
    %v189 = vunpack.c.l.b16 %v54
    %v190 = vunpack.c.l.b16 %v55
    %v191 = vunpack.c.l.b16 %v56
    %v192 = vunpack.c.l.b16 %v57
    %v193 = vunpack.c.l.b16 %v58
    %v194 = vunpack.c.l.b16 %v59
    %v195 = vunpack.c.l.b16 %v60
    %v196 = vunpack.c.l.b16 %v61
    %v197 = vunpack.c.l.b16 %v62
    %v198 = vunpack.c.l.b16 %v63
    %v199 = vunpack.c.l.b16 %v64
    %v200 = vunpack.c.l.b16 %v65
    %v201 = vunpack.c.l.b16 %v66
    %v202 = vunpack.c.l.b16 %v67
    %v203 = vunpack.c.l.b16 %v68
    %v204 = vunpack.c.l.b16 %v69
    %v205 = vunpack.c.l.b16 %v70
    %v206 = vunpack.c.l.b16 %v71
    %v207 = vunpack.c.l.b16 %v72
    %v208 = vunpack.c.l.b16 %v73
    %v209 = vunpack.c.l.b16 %v74
    %v210 = vunpack.c.l.b16 %v75
    %v211 = vunpack.c.l.b16 %v76
    %v212 = vunpack.c.l.b16 %v77
    %v213 = vunpack.c.l.b16 %v78
    %v214 = vunpack.c.l.b16 %v79
    %v215 = vunpack.c.l.b16 %v80
    %v216 = vunpack.c.l.b16 %v81
    %v217 = vunpack.c.l.b16 %v82
    %v218 = vunpack.c.l.b16 %v83
    %v219 = vunpack.c.l.b16 %v84
    %v220 = vunpack.c.l.b16 %v85
    %v221 = vunpack.c.l.b16 %v86
    %v222 = vunpack.c.l.b16 %v87
    %v223 = vunpack.c.l.b16 %v88
    %v224 = vunpack.c.l.b16 %v89
    %v225 = vunpack.c.l.b16 %v90
    %v226 = vunpack.c.l.b16 %v91
    %v227 = vunpack.c.l.b16 %v92
    %v228 = vunpack.c.l.b16 %v93
    %v229 = vunpack.c.l.b16 %v94
    %v230 = vunpack.c.l.b16 %v95
    %v231 = vunpack.c.l.b16 %v96
    %v232 = vpack.c.b16 %v169, %v168
    %v233 = vpack.c.b16 %v171, %v170
    %v234 = vpack.c.b16 %v173, %v172
    %v235 = vpack.c.b16 %v175, %v174
    %v236 = vpack.c.b16 %v177, %v176
    %v237 = vpack.c.b16 %v179, %v178
    %v238 = vpack.c.b16 %v181, %v180
    %v239 = vpack.c.b16 %v183, %v182
    %v240 = vpack.c.b16 %v185, %v184
    %v241 = vpack.c.b16 %v187, %v186
    %v242 = vpack.c.b16 %v189, %v188
    %v243 = vpack.c.b16 %v191, %v190
    %v244 = vpack.c.b16 %v193, %v192
    %v245 = vpack.c.b16 %v195, %v194
    %v246 = vpack.c.b16 %v197, %v196
    %v247 = vpack.c.b16 %v199, %v198
    %v248 = vpack.c.b16 %v201, %v200
    %v249 = vpack.c.b16 %v203, %v202
    %v250 = vpack.c.b16 %v205, %v204
    %v251 = vpack.c.b16 %v207, %v206
    %v252 = vpack.c.b16 %v209, %v208
    %v253 = vpack.c.b16 %v211, %v210
    %v254 = vpack.c.b16 %v213, %v212
    %v255 = vpack.c.b16 %v215, %v214
    %v256 = vpack.c.b16 %v217, %v216
    %v257 = vpack.c.b16 %v219, %v218
    %v258 = vpack.c.b16 %v221, %v220
    %v259 = vpack.c.b16 %v223, %v222
    %v260 = vpack.c.b16 %v225, %v224
    %v261 = vpack.c.b16 %v227, %v226
    %v262 = vpack.c.b16 %v229, %v228
    %v263 = vpack.c.b16 %v231, %v230
    %296 = vmatprep.subr.bf16.mxu0 0
    %297 = vmatpush1.bf16.msra.mxu0 %v239
    %298 = vmatprep.subr.bf16.mxu0 0
    %299 = vmatpush1.bf16.msra.mxu0 %v238
    %300 = vmatprep.subr.bf16.mxu0 0
    %301 = vmatpush1.bf16.msra.mxu0 %v237
    %302 = vmatprep.subr.bf16.mxu0 0
    %303 = vmatpush1.bf16.msra.mxu0 %v236
    %304 = vmatprep.subr.bf16.mxu0 0
    %305 = vmatpush1.bf16.msra.mxu0 %v235
    %306 = vmatprep.subr.bf16.mxu0 0
    %307 = vmatpush1.bf16.msra.mxu0 %v234
    %308 = vmatprep.subr.bf16.mxu0 0
    %309 = vmatpush1.bf16.msra.mxu0 %v233
    %310 = vmatprep.subr.bf16.mxu0 0
    %311 = vmatpush1.bf16.msra.mxu0 %v232
    %312 = vmatprep.subr.bf16.mxu0 0
    %313 = vmatpush2.bf16.msra.mxu0 %v247
    %314 = vmatprep.subr.bf16.mxu0 0
    %315 = vmatpush2.bf16.msra.mxu0 %v246
    %316 = vmatprep.subr.bf16.mxu0 0
    %317 = vmatpush2.bf16.msra.mxu0 %v245
    %318 = vmatprep.subr.bf16.mxu0 0
    %319 = vmatpush2.bf16.msra.mxu0 %v244
    %320 = vmatprep.subr.bf16.mxu0 0
    %321 = vmatpush2.bf16.msra.mxu0 %v243
    %322 = vmatprep.subr.bf16.mxu0 0
    %323 = vmatpush2.bf16.msra.mxu0 %v242
    %324 = vmatprep.subr.bf16.mxu0 0
    %325 = vmatpush2.bf16.msra.mxu0 %v241
    %326 = vmatprep.subr.bf16.mxu0 0
    %327 = vmatpush2.bf16.msra.mxu0 %v240
    %328 = vmatprep.mubr.bf16.mxu0 %v30
    %329 = vmatmul.mubr.bf16.gmra.mxu0 %v29
    %v330 = vpop.f32.mrf.mxu0
    %v331 = vadd.f32 %v102, %v330
    %v332 = vpop.f32.mrf.mxu0
    %v333 = vpop.f32.mrf.mxu0
    %v334 = vadd.f32 %v102, %v333
    %v335 = vpop.f32.mrf.mxu0
    %336 = vdwg.mxu0
    %337 = vmatprep.subr.bf16.mxu0 0
    %338 = vmatpush1.bf16.msra.mxu0 %v255
    %339 = vmatprep.subr.bf16.mxu0 0
    %340 = vmatpush1.bf16.msra.mxu0 %v254
    %341 = vmatprep.subr.bf16.mxu0 0
    %342 = vmatpush1.bf16.msra.mxu0 %v253
    %343 = vmatprep.subr.bf16.mxu0 0
    %344 = vmatpush1.bf16.msra.mxu0 %v252
    %345 = vmatprep.subr.bf16.mxu0 0
    %346 = vmatpush1.bf16.msra.mxu0 %v251
    %347 = vmatprep.subr.bf16.mxu0 0
    %348 = vmatpush1.bf16.msra.mxu0 %v250
    %349 = vmatprep.subr.bf16.mxu0 0
    %350 = vmatpush1.bf16.msra.mxu0 %v249
    %351 = vmatprep.subr.bf16.mxu0 0
    %352 = vmatpush1.bf16.msra.mxu0 %v248
    %353 = vmatprep.subr.bf16.mxu0 0
    %354 = vmatpush2.bf16.msra.mxu0 %v263
    %355 = vmatprep.subr.bf16.mxu0 0
    %356 = vmatpush2.bf16.msra.mxu0 %v262
    %357 = vmatprep.subr.bf16.mxu0 0
    %358 = vmatpush2.bf16.msra.mxu0 %v261
    %359 = vmatprep.subr.bf16.mxu0 0
    %360 = vmatpush2.bf16.msra.mxu0 %v260
    %361 = vmatprep.subr.bf16.mxu0 0
    %362 = vmatpush2.bf16.msra.mxu0 %v259
    %363 = vmatprep.subr.bf16.mxu0 0
    %364 = vmatpush2.bf16.msra.mxu0 %v258
    %365 = vmatprep.subr.bf16.mxu0 0
    %366 = vmatpush2.bf16.msra.mxu0 %v257
    %367 = vmatprep.subr.bf16.mxu0 0
    %368 = vmatpush2.bf16.msra.mxu0 %v256
    %369 = vmatprep.mubr.bf16.mxu0 %v32
    %370 = vmatmul.mubr.bf16.gmra.mxu0 %v31
    %v371 = vpop.f32.mrf.mxu0
    %v372 = vadd.f32 %v331, %v371
    %v373 = vpop.f32.mrf.mxu0
    %v374 = vpop.f32.mrf.mxu0
    %v375 = vadd.f32 %v334, %v374
    %v376 = vpop.f32.mrf.mxu0
    %377 = vdwg.mxu0
    %v378 = vmax.f32 %v372, 0.0
    %v379 = vmax.f32 %v375, 0.0
    %v380 = vpack.c.bf16 %v379, %v378
    %v381 = vld [vmem:[%s3] sm:$0xf]
    %v382 = vld [vmem:[%s3 + $0x4] sm:$0xf]
    %v383 = vld [vmem:[%s3 + $0x8] sm:$0xf]
    %v384 = vld [vmem:[%s3 + $0xc] sm:$0xf]
    %v385 = vld [vmem:[%s3 + $0x10] sm:$0xf]
    %v386 = vld [vmem:[%s3 + $0x14] sm:$0xf]
    %v387 = vld [vmem:[%s3 + $0x18] sm:$0xf]
    %v388 = vld [vmem:[%s3 + $0x1c] sm:$0xf]
    %v389 = vld [vmem:[%s3 + $0x20] sm:$0xf]
    %v390 = vld [vmem:[%s3 + $0x24] sm:$0xf]
    %v391 = vld [vmem:[%s3 + $0x28] sm:$0xf]
    %v392 = vld [vmem:[%s3 + $0x2c] sm:$0xf]
    %v393 = vld [vmem:[%s3 + $0x30] sm:$0xf]
    %v394 = vld [vmem:[%s3 + $0x34] sm:$0xf]
    %v395 = vld [vmem:[%s3 + $0x38] sm:$0xf]
    %v396 = vld [vmem:[%s3 + $0x3c] sm:$0xf]
    %v397 = vld [vmem:[%s4] sm:$0x1]
    %v399 = vlaneseq
    %v400 = vshrl.u32 %v399, 7
    %v401 = vsub.s32 0, %v400
    %v402 = vrot.slane %v397, %v401
    %v420 = vunpack.c.l.b16 %v381
    %v421 = vunpack.c.l.b16 %v382
    %v422 = vunpack.c.l.b16 %v383
    %v423 = vunpack.c.l.b16 %v384
    %v424 = vunpack.c.l.b16 %v385
    %v425 = vunpack.c.l.b16 %v386
    %v426 = vunpack.c.l.b16 %v387
    %v427 = vunpack.c.l.b16 %v388
    %v428 = vunpack.c.l.b16 %v389
    %v429 = vunpack.c.l.b16 %v390
    %v430 = vunpack.c.l.b16 %v391
    %v431 = vunpack.c.l.b16 %v392
    %v432 = vunpack.c.l.b16 %v393
    %v433 = vunpack.c.l.b16 %v394
    %v434 = vunpack.c.l.b16 %v395
    %v435 = vunpack.c.l.b16 %v396
    %v436 = vpack.c.b16 %v421, %v420
    %v437 = vpack.c.b16 %v423, %v422
    %v438 = vpack.c.b16 %v425, %v424
    %v439 = vpack.c.b16 %v427, %v426
    %v440 = vpack.c.b16 %v429, %v428
    %v441 = vpack.c.b16 %v431, %v430
    %v442 = vpack.c.b16 %v433, %v432
    %v443 = vpack.c.b16 %v435, %v434
    %452 = vmatprep.subr.bf16.mxu0 0
    %453 = vmatpush1.bf16.msra.mxu0 %v443
    %454 = vmatprep.subr.bf16.mxu0 0
    %455 = vmatpush1.bf16.msra.mxu0 %v442
    %456 = vmatprep.subr.bf16.mxu0 0
    %457 = vmatpush1.bf16.msra.mxu0 %v441
    %458 = vmatprep.subr.bf16.mxu0 0
    %459 = vmatpush1.bf16.msra.mxu0 %v440
    %460 = vmatprep.subr.bf16.mxu0 0
    %461 = vmatpush1.bf16.msra.mxu0 %v439
    %462 = vmatprep.subr.bf16.mxu0 0
    %463 = vmatpush1.bf16.msra.mxu0 %v438
    %464 = vmatprep.subr.bf16.mxu0 0
    %465 = vmatpush1.bf16.msra.mxu0 %v437
    %466 = vmatprep.subr.bf16.mxu0 0
    %467 = vmatpush1.bf16.msra.mxu0 %v436
    %468 = vmatprep.subr.bf16.mxu0 0
    %469 = vmatpush2.bf16.msra.mxu0 0
    %470 = vmatprep.subr.bf16.mxu0 0
    %471 = vmatpush2.bf16.msra.mxu0 0
    %472 = vmatprep.subr.bf16.mxu0 0
    %473 = vmatpush2.bf16.msra.mxu0 0
    %474 = vmatprep.subr.bf16.mxu0 0
    %475 = vmatpush2.bf16.msra.mxu0 0
    %476 = vmatprep.subr.bf16.mxu0 0
    %477 = vmatpush2.bf16.msra.mxu0 0
    %478 = vmatprep.subr.bf16.mxu0 0
    %479 = vmatpush2.bf16.msra.mxu0 0
    %480 = vmatprep.subr.bf16.mxu0 0
    %481 = vmatpush2.bf16.msra.mxu0 0
    %482 = vmatprep.subr.bf16.mxu0 0
    %483 = vmatpush2.bf16.msra.mxu0 0
    %484 = vmatprep.mubr.bf16.mxu0 0
    %485 = vmatmul.mubr.bf16.gmra.mxu0 %v380
    %v486 = vpop.f32.mrf.mxu0
    %v487 = vadd.f32 %v402, %v486
    %v488 = vpop.f32.mrf.mxu0
    %v489 = vpop.f32.mrf.mxu0
    %v490 = vadd.f32 %v402, %v489
    %v491 = vpop.f32.mrf.mxu0
    %492 = vdwg.mxu0
    %v493 = vpack.c.bf16 %v490, %v487
    %v495 = vunpack.c.l.b16 %v493
    %v496 = vunpack.c.h.b16 %v493
    %v497 = vpack.c.b16 %v495, %v495
    %v498 = vpack.c.b16 %v496, %v496
    %501 = vst [vmem:[#allocation2] sm:$0xf] %v497
    %502 = vst [vmem:[#allocation2 + $0x4] sm:$0xf] %v498
    // Predicated region
    $region22: #{classifier_forward.1} parent=1 // pred_check
      _
    $region23: #{classifier_forward.1} parent=1 // pred_check_branch
      %504 = sbr.rel (0) target = $region25
    $region24: #{classifier_forward.1} parent=1 // pred_region
      // Predicated region
      $region26: #{classifier_forward.1} parent=24 // pred_check
        _
      $region27: #{classifier_forward.1} parent=24 // pred_check_branch
        %506 = sbr.rel (0) target = $region29
      $region28: #{classifier_forward.1} parent=24 // pred_region
        // Predicated region
        $region30: #{classifier_forward.1} parent=28 // pred_check
          _
        $region31: #{classifier_forward.1} parent=28 // pred_check_branch
          %508 = sbr.rel target = $region33
        $region32: #{classifier_forward.1} parent=28 // pred_region
          // Predicated region
          $region45: #{classifier_forward.1} parent=32 // pred_check
            _
          $region46: #{classifier_forward.1} parent=32 // pred_check_branch
            %524 = sbr.rel (0) target = $region48
          $region47: #{classifier_forward.1} parent=32 // pred_region
            %s526 = ssub.s32 16, 1
            loop: start=0, step=1, limit=1
            $region49: #{classifier_forward.1} parent=47 // loop_pre_header
              _
            $region50: #{classifier_forward.1} parent=47 // loop_header
              %s528 = sphi 0, %s532
              %p529 = scmp.ge.s32.totalorder %s528, 1
              %s533 = sphi [#allocation2], [#allocation2]
              %s534 = sphi %s5, %s5
            $region51: #{classifier_forward.1} parent=47 // loop_header_branch
              %531 = sbr.rel (%p529) target = $region55
            $region52: #{classifier_forward.1} parent=47 // loop_body
              %v535 = vld [vmem:[%s533] sm:%s526]
              %536 = vst [vmem:[%s534] sm:%s526] %v535
            $region53: #{classifier_forward.1} parent=47 // loop_footer
              %s532 = sadd.s32 1, %s528
            $region54: #{classifier_forward.1} parent=47 // loop_footer_branch
              %527 = sbr.rel target = $region50
            $region55: #{classifier_forward.1} parent=47 // loop_exit
              _
          $region48: #{classifier_forward.1} parent=32 // pred_fallthru
            _
        $region33: #{classifier_forward.1} parent=28 // pred_fallthru
          _
        // Predicated region
        $region34: #{classifier_forward.1} parent=28 // pred_check
          _
        $region35: #{classifier_forward.1} parent=28 // pred_check_branch
          %510 = sbr.rel (0) target = $region37
        $region36: #{classifier_forward.1} parent=28 // pred_region
          %s512 = ssub.s32 16, 1
          loop: start=0, step=1, limit=1
          $region38: #{classifier_forward.1} parent=36 // loop_pre_header
            _
          $region39: #{classifier_forward.1} parent=36 // loop_header
            %s514 = sphi 0, %s518
            %p515 = scmp.ge.s32.totalorder %s514, 1
            %s519 = sphi [#allocation2], [#allocation2]
            %s520 = sphi %s5, %s5
          $region40: #{classifier_forward.1} parent=36 // loop_header_branch
            %517 = sbr.rel (%p515) target = $region44
          $region41: #{classifier_forward.1} parent=36 // loop_body
            %v521 = vld [vmem:[%s519] sm:%s512]
            %522 = vst [vmem:[%s520] sm:%s512] %v521
          $region42: #{classifier_forward.1} parent=36 // loop_footer
            %s518 = sadd.s32 1, %s514
          $region43: #{classifier_forward.1} parent=36 // loop_footer_branch
            %513 = sbr.rel target = $region39
          $region44: #{classifier_forward.1} parent=36 // loop_exit
            _
        $region37: #{classifier_forward.1} parent=28 // pred_fallthru
          _
      $region29: #{classifier_forward.1} parent=24 // pred_fallthru
        _
      %537 = vnop
    $region25: #{classifier_forward.1} parent=1 // pred_fallthru
      _
    // Predicated region
    $region56: #{classifier_forward.1} parent=1 // pred_check
      _
    $region57: #{classifier_forward.1} parent=1 // pred_check_branch
      %539 = sbr.rel (0) target = $region59
    $region58: #{classifier_forward.1} parent=1 // pred_region
      _
    $region59: #{classifier_forward.1} parent=1 // pred_fallthru
      _

</llo_original>
